<compile_context>
chip_gen: v6e
topology: v6e:2x2x1
jax: 0.10.0
libtpu: 0.0.40
codegen_flags: <defaults>
</compile_context>

<pallas_src>
import jax
import jax.numpy as jnp
from jax.experimental import pallas as pl
from jax.experimental.pallas import tpu as pltpu


def _round_up(x, m):
    return ((x + m - 1) // m) * m


# ---------------------------------------------------------------------------
# Stage 1: tiny MLP, computed exactly once (whole problem fits VMEM).
# ---------------------------------------------------------------------------
def mlp_kernel(x_ref, w1_ref, b1_ref, w2_ref, b2_ref, h_ref):
    h = jnp.dot(x_ref[...], w1_ref[...], preferred_element_type=jnp.float32)
    h = jnp.maximum(h + b1_ref[...], 0.0)
    # TODO(synk): dropout is identity in eval mode; training-mode dropout would
    # use pltpu.prng_seed + pltpu.stateful_bernoulli.
    h = jnp.dot(h, w2_ref[...], preferred_element_type=jnp.float32)
    h_ref[...] = (h + b2_ref[...]).astype(h_ref.dtype)


def ppnp2_mlp(x, w1_t, b1, w2_t, b2, nclass_pad):
    """Returns H = relu(X@W1t+b1)@W2t+b2 with the class dim zero-padded to
    nclass_pad (a multiple of 128) so downstream stores are lane-dense."""
    n, _ = x.shape
    nhid = w1_t.shape[1]
    nclass = w2_t.shape[1]

    w2_tp = jnp.zeros((nhid, nclass_pad), jnp.float32).at[:, :nclass].set(w2_t)
    b2_p = jnp.zeros((1, nclass_pad), jnp.float32).at[:, :nclass].set(b2)

    full = lambda a: pl.BlockSpec(a.shape, lambda: (0,) * a.ndim)

    return pl.pallas_call(
        mlp_kernel,
        out_shape=jax.ShapeDtypeStruct((n, nclass_pad), jnp.float32),
        in_specs=[full(x), full(w1_t), full(b1), full(w2_tp), full(b2_p)],
        out_specs=pl.BlockSpec((n, nclass_pad), lambda: (0, 0)),
    )(x, w1_t, b1, w2_tp, b2_p)


# ---------------------------------------------------------------------------
# Stage 2: Pi @ H propagation, gridded over Pi row tiles (memory-bound on Pi).
# ---------------------------------------------------------------------------
def propagate_kernel(pi_ref, h_ref, out_ref):
    # One bf16 Pi row-tile x full bf16 H, accumulated in f32 on the MXU.
    out_ref[...] = jnp.dot(
        pi_ref[...], h_ref[...], preferred_element_type=jnp.float32
    ).astype(out_ref.dtype)


def ppnp2_propagate(pi, h, *, tile_rows=512):
    """pi: [N, K] (K == h rows), h: [K, nclass_pad]  ->  [N, nclass_pad] f32."""
    n_rows, k = pi.shape
    nclass_pad = h.shape[1]

    # Row-tile height: multiple of 8 (sublane), capped at tile_rows, and pad
    # Pi's rows with zeros so the grid divides evenly (zero rows -> zero
    # outputs, sliced off below).
    tile = min(tile_rows, _round_up(n_rows, 8))
    n_rows_pad = _round_up(n_rows, tile)
    if n_rows_pad != n_rows:
        pi = jnp.zeros((n_rows_pad, k), pi.dtype).at[:n_rows].set(pi)

    grid = (n_rows_pad // tile,)

    out_pad = pl.pallas_call(
        propagate_kernel,
        out_shape=jax.ShapeDtypeStruct((n_rows_pad, nclass_pad), jnp.float32),
        grid=grid,
        in_specs=[
            pl.BlockSpec((tile, k), lambda i: (i, 0)),        # Pi row tile
            pl.BlockSpec((k, nclass_pad), lambda i: (0, 0)),  # full H (resident)
        ],
        out_specs=pl.BlockSpec((tile, nclass_pad), lambda i: (i, 0)),
        compiler_params=pltpu.CompilerParams(
            dimension_semantics=("parallel",),   # megacore sharding on v7x
            vmem_limit_bytes=48 << 20,           # headroom on v7x's 64 MiB VMEM
        ),
    )(pi, h)

    return out_pad[:n_rows]


# ---------------------------------------------------------------------------
# Full forward.
# ---------------------------------------------------------------------------
def ppnp2_forward(x, w1_t, b1, w2_t, b2, pi, *, tile_rows=512,
                  propagate_dtype=jnp.bfloat16):
    """x: [N, nfeat]; w1_t: [nfeat, nhid]; b1: [1, nhid];
    w2_t: [nhid, nclass]; b2: [1, nclass]; pi: [N, N] -> [N, nclass] f32."""
    n, _ = x.shape
    nclass = w2_t.shape[1]
    nclass_pad = _round_up(nclass, 128)

    h_pad = ppnp2_mlp(x, w1_t, b1, w2_t, b2, nclass_pad)          # [N, nclass_pad] f32
    out_pad = ppnp2_propagate(
        pi.astype(propagate_dtype),
        h_pad.astype(propagate_dtype),
        tile_rows=tile_rows,
    )                                                             # [N, nclass_pad] f32
    return out_pad[:, :nclass]


def reference_forward(x, w1_t, b1, w2_t, b2, pi):
    h = jnp.maximum(x @ w1_t + b1, 0.0)
    h = h @ w2_t + b2
    return pi @ h


if __name__ == "__main__":
    # Small shapes consistent with the module: N nodes, nfeat -> nhid -> nclass.
    # N=200 with tile_rows=64 exercises the gridded, row-padded propagation path.
    N, nfeat, nhid, nclass = 200, 64, 64, 16

    key = jax.random.PRNGKey(0)
    kx, kw1, kb1, kw2, kb2, kpi = jax.random.split(key, 6)

    x = jax.random.normal(kx, (N, nfeat), dtype=jnp.float32)

    # Deterministic parameter init (synthetic; matches nn.Linear shapes).
    # PyTorch stores Linear weight as [out, in]; we pass its transpose [in, out].
    w1_t = jax.random.normal(kw1, (nfeat, nhid), dtype=jnp.float32) * (1.0 / jnp.sqrt(nfeat))
    b1 = jax.random.normal(kb1, (1, nhid), dtype=jnp.float32) * 0.01
    w2_t = jax.random.normal(kw2, (nhid, nclass), dtype=jnp.float32) * (1.0 / jnp.sqrt(nhid))
    b2 = jax.random.normal(kb2, (1, nclass), dtype=jnp.float32) * 0.01

    # Synthetic PPR matrix Pi: row-stochastic [N, N] (what norm_adj would set).
    pi = jax.nn.softmax(jax.random.normal(kpi, (N, N), dtype=jnp.float32), axis=-1)

    out = ppnp2_forward(x, w1_t, b1, w2_t, b2, pi, tile_rows=64)
    out = jax.block_until_ready(out)

    ref = reference_forward(x, w1_t, b1, w2_t, b2, pi)
    assert out.shape == (N, nclass)
    # bf16 Pi/H with f32 accumulation: compare at bf16-appropriate tolerance.
    assert jnp.allclose(out, ref, atol=1e-2, rtol=1e-2), "mismatch vs reference"

    print("KERNEL_OK")
</pallas_src>

<mosaic_0001>
module attributes {stable_mosaic.version = 11 : i64} {
  func.func @mlp_kernel(%arg0: memref<200x64xf32, #tpu.memory_space<vmem>>, %arg1: memref<64x64xf32, #tpu.memory_space<vmem>>, %arg2: memref<1x64xf32, #tpu.memory_space<vmem>>, %arg3: memref<64x128xf32, #tpu.memory_space<vmem>>, %arg4: memref<1x128xf32, #tpu.memory_space<vmem>>, %arg5: memref<200x128xf32, #tpu.memory_space<vmem>>) attributes {dimension_semantics = [], scalar_prefetch = 0 : i64, scratch_operands = 0 : i64, tpu.core_type = #tpu.core_type<tc>} {
    %c0 = arith.constant 0 : index
    %c0_0 = arith.constant 0 : index
    %0 = vector.load %arg0[%c0, %c0_0] : memref<200x64xf32, #tpu.memory_space<vmem>>, vector<200x64xf32>
    %c0_1 = arith.constant 0 : index
    %c0_2 = arith.constant 0 : index
    %1 = vector.load %arg1[%c0_1, %c0_2] : memref<64x64xf32, #tpu.memory_space<vmem>>, vector<64x64xf32>
    %cst = arith.constant dense<0.000000e+00> : vector<200x64xf32>
    %2 = tpu.matmul %0, %1, %cst {dimension_numbers = #tpu.dot_dimension_numbers<[1], [0], [0], [1], [0, 0, 1, 1], [], []>} : vector<200x64xf32>, vector<64x64xf32>, vector<200x64xf32> -> vector<200x64xf32>
    %c0_3 = arith.constant 0 : index
    %c0_4 = arith.constant 0 : index
    %3 = vector.load %arg2[%c0_3, %c0_4] : memref<1x64xf32, #tpu.memory_space<vmem>>, vector<1x64xf32>
    %4 = vector.broadcast %3 : vector<1x64xf32> to vector<200x64xf32>
    %5 = arith.addf %2, %4 : vector<200x64xf32>
    %cst_5 = arith.constant 0.000000e+00 : f32
    %6 = vector.broadcast %cst_5 : f32 to vector<200x64xf32>
    %7 = arith.maximumf %5, %6 : vector<200x64xf32>
    %c0_6 = arith.constant 0 : index
    %c0_7 = arith.constant 0 : index
    %8 = vector.load %arg3[%c0_6, %c0_7] : memref<64x128xf32, #tpu.memory_space<vmem>>, vector<64x128xf32>
    %cst_8 = arith.constant dense<0.000000e+00> : vector<200x128xf32>
    %9 = tpu.matmul %7, %8, %cst_8 {dimension_numbers = #tpu.dot_dimension_numbers<[1], [0], [0], [1], [0, 0, 1, 1], [], []>} : vector<200x64xf32>, vector<64x128xf32>, vector<200x128xf32> -> vector<200x128xf32>
    %c0_9 = arith.constant 0 : index
    %c0_10 = arith.constant 0 : index
    %10 = vector.load %arg4[%c0_9, %c0_10] : memref<1x128xf32, #tpu.memory_space<vmem>>, vector<1x128xf32>
    %11 = vector.broadcast %10 : vector<1x128xf32> to vector<200x128xf32>
    %12 = arith.addf %9, %11 : vector<200x128xf32>
    %c0_11 = arith.constant 0 : index
    %c0_12 = arith.constant 0 : index
    %13 = vector.load %arg5[%c0_11, %c0_12] : memref<200x128xf32, #tpu.memory_space<vmem>>, vector<200x128xf32>
    tpu.vector_store %arg5[%c0_11, %c0_12], %12 {strides = array<i32>} : memref<200x128xf32, #tpu.memory_space<vmem>>, vector<200x128xf32>,
    return
  }
}

</mosaic_0001>

<llo_original>
// kernel: tpu_custom_call.1
$region0: #{tpu_custom_call.1}
  #allocation0 [shape = 'u32[]', space=smem, size = 0x4, offset = 0x4, fixed_abs, tag = 'smem constant byte address 0x4 - core index']
  #allocation1 [shape = 'u32[144,128]{1,0:T(1,128)}', space=vmem, size = 0x12000, scoped, tag = 'internal scratch']
  %s0 = inlined_call_operand.vmem [shape: f32[200,64], index: 0, kind: input, shape index: {}]
  %s1 = inlined_call_operand.vmem [shape: f32[64,64], index: 1, kind: input, shape index: {}]
  %s2 = inlined_call_operand.vmem [shape: f32[1,64], index: 2, kind: input, shape index: {}]
  %s3 = inlined_call_operand.vmem [shape: f32[64,128], index: 3, kind: input, shape index: {}]
  %s4 = inlined_call_operand.vmem [shape: f32[1,128], index: 4, kind: input, shape index: {}]
  %s5 = inlined_call_operand.hbm [shape: f32[200,128], index: 5, kind: output, shape index: {}]
  %s6 = sld [smem:[#allocation0]]
  $region30: #{tpu_custom_call.1} parent=0
    _
  %s8 = ssub.s32 1, %s6
  %s9 = scalar_select 0, %s8, %s6
  $region1: #{tpu_custom_call.1} parent=0
    #allocation2 [shape = 'u8[102400]{0}', space=vmem, size = 0x19000, scoped, tag = 'output window, operand 0, single buffered']
    #allocation3 [shape = 's32[1]{0}', space=sflag, size = 0x4, scoped, tag = 'scoped memory for tpu_custom_call.1']
    %10 = vsyncpa [#allocation3], 0
    // Predicated region
    $region2: #{tpu_custom_call.1} parent=1 // pred_check
      _
    $region3: #{tpu_custom_call.1} parent=1 // pred_check_branch
      %12 = sbr.rel (0) target = $region5
    $region4: #{tpu_custom_call.1} parent=1 // pred_region
      _
    $region5: #{tpu_custom_call.1} parent=1 // pred_fallthru
      _
    // Predicated region
    $region6: #{tpu_custom_call.1} parent=1 // pred_check
      _
    $region7: #{tpu_custom_call.1} parent=1 // pred_check_branch
      %14 = sbr.rel (0) target = $region9
    $region8: #{tpu_custom_call.1} parent=1 // pred_region
      _
    $region9: #{tpu_custom_call.1} parent=1 // pred_fallthru
      _
    // Predicated region
    $region10: #{tpu_custom_call.1} parent=1 // pred_check
      _
    $region11: #{tpu_custom_call.1} parent=1 // pred_check_branch
      %16 = sbr.rel (0) target = $region13
    $region12: #{tpu_custom_call.1} parent=1 // pred_region
      _
    $region13: #{tpu_custom_call.1} parent=1 // pred_fallthru
      _
    // Predicated region
    $region14: #{tpu_custom_call.1} parent=1 // pred_check
      _
    $region15: #{tpu_custom_call.1} parent=1 // pred_check_branch
      %18 = sbr.rel (0) target = $region17
    $region16: #{tpu_custom_call.1} parent=1 // pred_region
      _
    $region17: #{tpu_custom_call.1} parent=1 // pred_fallthru
      _
    // Predicated region
    $region18: #{tpu_custom_call.1} parent=1 // pred_check
      _
    $region19: #{tpu_custom_call.1} parent=1 // pred_check_branch
      %20 = sbr.rel (0) target = $region21
    $region20: #{tpu_custom_call.1} parent=1 // pred_region
      _
    $region21: #{tpu_custom_call.1} parent=1 // pred_fallthru
      _
    %v21 = vld [vmem:[%s0] sm:$0xff]
    %v22 = vld [vmem:[%s0 + $0x8] sm:$0xff]
    %v23 = vld [vmem:[%s0 + $0x10] sm:$0xff]
    %v24 = vld [vmem:[%s0 + $0x18] sm:$0xff]
    %v25 = vld [vmem:[%s0 + $0x20] sm:$0xff]
    %v26 = vld [vmem:[%s0 + $0x28] sm:$0xff]
    %v27 = vld [vmem:[%s0 + $0x30] sm:$0xff]
    %v28 = vld [vmem:[%s0 + $0x38] sm:$0xff]
    %v29 = vld [vmem:[%s0 + $0x40] sm:$0xff]
    %v30 = vld [vmem:[%s0 + $0x48] sm:$0xff]
    %v31 = vld [vmem:[%s0 + $0x50] sm:$0xff]
    %v32 = vld [vmem:[%s0 + $0x58] sm:$0xff]
    %v33 = vld [vmem:[%s0 + $0x60] sm:$0xff]
    %v34 = vld [vmem:[%s0 + $0x68] sm:$0xff]
    %v35 = vld [vmem:[%s0 + $0x70] sm:$0xff]
    %v36 = vld [vmem:[%s0 + $0x78] sm:$0xff]
    %v37 = vld [vmem:[%s0 + $0x80] sm:$0xff]
    %v38 = vld [vmem:[%s0 + $0x88] sm:$0xff]
    %v39 = vld [vmem:[%s0 + $0x90] sm:$0xff]
    %v40 = vld [vmem:[%s0 + $0x98] sm:$0xff]
    %v41 = vld [vmem:[%s0 + $0xa0] sm:$0xff]
    %v42 = vld [vmem:[%s0 + $0xa8] sm:$0xff]
    %v43 = vld [vmem:[%s0 + $0xb0] sm:$0xff]
    %v44 = vld [vmem:[%s0 + $0xb8] sm:$0xff]
    %v45 = vld [vmem:[%s0 + $0xc0] sm:$0xff]
    %v46 = vld [vmem:[%s1] sm:$0xff]
    %v47 = vld [vmem:[%s1 + $0x8] sm:$0xff]
    %v48 = vld [vmem:[%s1 + $0x10] sm:$0xff]
    %v49 = vld [vmem:[%s1 + $0x18] sm:$0xff]
    %v50 = vld [vmem:[%s1 + $0x20] sm:$0xff]
    %v51 = vld [vmem:[%s1 + $0x28] sm:$0xff]
    %v52 = vld [vmem:[%s1 + $0x30] sm:$0xff]
    %v53 = vld [vmem:[%s1 + $0x38] sm:$0xff]
    %v54 = vld [vmem:[%s2] sm:$0x1]
    %v56 = vlaneseq
    %v57 = vshrl.u32 %v56, 7
    %v58 = vsub.s32 0, %v57
    %v59 = vrot.slane %v54, %v58
    %vm61 = vcmask 523264
    %v63 = vsel %vm61, %v21, 0
    %v66 = vsel %vm61, %v22, 0
    %v69 = vsel %vm61, %v23, 0
    %v72 = vsel %vm61, %v24, 0
    %v75 = vsel %vm61, %v25, 0
    %v78 = vsel %vm61, %v26, 0
    %v81 = vsel %vm61, %v27, 0
    %v84 = vsel %vm61, %v28, 0
    %v87 = vsel %vm61, %v29, 0
    %v90 = vsel %vm61, %v30, 0
    %v93 = vsel %vm61, %v31, 0
    %v96 = vsel %vm61, %v32, 0
    %v99 = vsel %vm61, %v33, 0
    %v102 = vsel %vm61, %v34, 0
    %v105 = vsel %vm61, %v35, 0
    %v108 = vsel %vm61, %v36, 0
    %v111 = vsel %vm61, %v37, 0
    %v114 = vsel %vm61, %v38, 0
    %v117 = vsel %vm61, %v39, 0
    %v120 = vsel %vm61, %v40, 0
    %v123 = vsel %vm61, %v41, 0
    %v126 = vsel %vm61, %v42, 0
    %v129 = vsel %vm61, %v43, 0
    %v132 = vsel %vm61, %v44, 0
    %v135 = vsel %vm61, %v45, 0
    %137 = vmatprep.subr.mxu0 0.0
    %138 = vmatpush1.msra.mxu0 0.0
    %139 = vmatprep.subr.mxu0 0.0
    %140 = vmatpush1.msra.mxu0 0.0
    %141 = vmatprep.subr.mxu0 0.0
    %142 = vmatpush1.msra.mxu0 0.0
    %143 = vmatprep.subr.mxu0 0.0
    %144 = vmatpush1.msra.mxu0 0.0
    %145 = vmatprep.subr.mxu0 0.0
    %146 = vmatpush1.msra.mxu0 0.0
    %147 = vmatprep.subr.mxu0 0.0
    %148 = vmatpush1.msra.mxu0 0.0
    %149 = vmatprep.subr.mxu0 0.0
    %150 = vmatpush1.msra.mxu0 0.0
    %151 = vmatprep.subr.mxu0 0.0
    %152 = vmatpush1.msra.mxu0 0.0
    %153 = vmatprep.subr.mxu0 0.0
    %154 = vmatpush1.msra.mxu0 %v53
    %155 = vmatprep.subr.mxu0 0.0
    %156 = vmatpush1.msra.mxu0 %v52
    %157 = vmatprep.subr.mxu0 0.0
    %158 = vmatpush1.msra.mxu0 %v51
    %159 = vmatprep.subr.mxu0 0.0
    %160 = vmatpush1.msra.mxu0 %v50
    %161 = vmatprep.subr.mxu0 0.0
    %162 = vmatpush1.msra.mxu0 %v49
    %163 = vmatprep.subr.mxu0 0.0
    %164 = vmatpush1.msra.mxu0 %v48
    %165 = vmatprep.subr.mxu0 0.0
    %166 = vmatpush1.msra.mxu0 %v47
    %167 = vmatprep.subr.mxu0 0.0
    %168 = vmatpush1.msra.mxu0 %v46
    %169 = vmatprep.subr.mxu0 0.0
    %170 = vmatpush2.msra.mxu0 0.0
    %171 = vmatprep.subr.mxu0 0.0
    %172 = vmatpush2.msra.mxu0 0.0
    %173 = vmatprep.subr.mxu0 0.0
    %174 = vmatpush2.msra.mxu0 0.0
    %175 = vmatprep.subr.mxu0 0.0
    %176 = vmatpush2.msra.mxu0 0.0
    %177 = vmatprep.subr.mxu0 0.0
    %178 = vmatpush2.msra.mxu0 0.0
    %179 = vmatprep.subr.mxu0 0.0
    %180 = vmatpush2.msra.mxu0 0.0
    %181 = vmatprep.subr.mxu0 0.0
    %182 = vmatpush2.msra.mxu0 0.0
    %183 = vmatprep.subr.mxu0 0.0
    %184 = vmatpush2.msra.mxu0 0.0
    %185 = vmatprep.subr.mxu0 0.0
    %186 = vmatpush2.msra.mxu0 0.0
    %187 = vmatprep.subr.mxu0 0.0
    %188 = vmatpush2.msra.mxu0 0.0
    %189 = vmatprep.subr.mxu0 0.0
    %190 = vmatpush2.msra.mxu0 0.0
    %191 = vmatprep.subr.mxu0 0.0
    %192 = vmatpush2.msra.mxu0 0.0
    %193 = vmatprep.subr.mxu0 0.0
    %194 = vmatpush2.msra.mxu0 0.0
    %195 = vmatprep.subr.mxu0 0.0
    %196 = vmatpush2.msra.mxu0 0.0
    %197 = vmatprep.subr.mxu0 0.0
    %198 = vmatpush2.msra.mxu0 0.0
    %199 = vmatprep.subr.mxu0 0.0
    %200 = vmatpush2.msra.mxu0 0.0
    %201 = vmatprep.mubr.f32.mxu0 0.0
    %202 = vmatmul.mubr.f32.gmra.mxu0 %v63
    %v203 = vpop.f32.mrf.mxu0
    %v204 = vadd.f32 %v59, %v203
    %v205 = vpop.f32.mrf.mxu0
    %206 = vmatprep.mubr.f32.mxu0 0.0
    %207 = vmatmul.mubr.f32.gmra.mxu0 %v66
    %v208 = vpop.f32.mrf.mxu0
    %v209 = vadd.f32 %v59, %v208
    %v210 = vpop.f32.mrf.mxu0
    %211 = vmatprep.mubr.f32.mxu0 0.0
    %212 = vmatmul.mubr.f32.gmra.mxu0 %v69
    %v213 = vpop.f32.mrf.mxu0
    %v214 = vadd.f32 %v59, %v213
    %v215 = vpop.f32.mrf.mxu0
    %216 = vmatprep.mubr.f32.mxu0 0.0
    %217 = vmatmul.mubr.f32.gmra.mxu0 %v72
    %v218 = vpop.f32.mrf.mxu0
    %v219 = vadd.f32 %v59, %v218
    %v220 = vpop.f32.mrf.mxu0
    %221 = vmatprep.mubr.f32.mxu0 0.0
    %222 = vmatmul.mubr.f32.gmra.mxu0 %v75
    %v223 = vpop.f32.mrf.mxu0
    %v224 = vadd.f32 %v59, %v223
    %v225 = vpop.f32.mrf.mxu0
    %226 = vmatprep.mubr.f32.mxu0 0.0
    %227 = vmatmul.mubr.f32.gmra.mxu0 %v78
    %v228 = vpop.f32.mrf.mxu0
    %v229 = vadd.f32 %v59, %v228
    %v230 = vpop.f32.mrf.mxu0
    %231 = vmatprep.mubr.f32.mxu0 0.0
    %232 = vmatmul.mubr.f32.gmra.mxu0 %v81
    %v233 = vpop.f32.mrf.mxu0
    %v234 = vadd.f32 %v59, %v233
    %v235 = vpop.f32.mrf.mxu0
    %236 = vmatprep.mubr.f32.mxu0 0.0
    %237 = vmatmul.mubr.f32.gmra.mxu0 %v84
    %v238 = vpop.f32.mrf.mxu0
    %v239 = vadd.f32 %v59, %v238
    %v240 = vpop.f32.mrf.mxu0
    %241 = vmatprep.mubr.f32.mxu0 0.0
    %242 = vmatmul.mubr.f32.gmra.mxu0 %v87
    %v243 = vpop.f32.mrf.mxu0
    %v244 = vadd.f32 %v59, %v243
    %v245 = vpop.f32.mrf.mxu0
    %246 = vmatprep.mubr.f32.mxu0 0.0
    %247 = vmatmul.mubr.f32.gmra.mxu0 %v90
    %v248 = vpop.f32.mrf.mxu0
    %v249 = vadd.f32 %v59, %v248
    %v250 = vpop.f32.mrf.mxu0
    %251 = vmatprep.mubr.f32.mxu0 0.0
    %252 = vmatmul.mubr.f32.gmra.mxu0 %v93
    %v253 = vpop.f32.mrf.mxu0
    %v254 = vadd.f32 %v59, %v253
    %v255 = vpop.f32.mrf.mxu0
    %256 = vmatprep.mubr.f32.mxu0 0.0
    %257 = vmatmul.mubr.f32.gmra.mxu0 %v96
    %v258 = vpop.f32.mrf.mxu0
    %v259 = vadd.f32 %v59, %v258
    %v260 = vpop.f32.mrf.mxu0
    %261 = vmatprep.mubr.f32.mxu0 0.0
    %262 = vmatmul.mubr.f32.gmra.mxu0 %v99
    %v263 = vpop.f32.mrf.mxu0
    %v264 = vadd.f32 %v59, %v263
    %v265 = vpop.f32.mrf.mxu0
    %266 = vmatprep.mubr.f32.mxu0 0.0
    %267 = vmatmul.mubr.f32.gmra.mxu0 %v102
    %v268 = vpop.f32.mrf.mxu0
    %v269 = vadd.f32 %v59, %v268
    %v270 = vpop.f32.mrf.mxu0
    %271 = vmatprep.mubr.f32.mxu0 0.0
    %272 = vmatmul.mubr.f32.gmra.mxu0 %v105
    %v273 = vpop.f32.mrf.mxu0
    %v274 = vadd.f32 %v59, %v273
    %v275 = vpop.f32.mrf.mxu0
    %276 = vmatprep.mubr.f32.mxu0 0.0
    %277 = vmatmul.mubr.f32.gmra.mxu0 %v108
    %v278 = vpop.f32.mrf.mxu0
    %v279 = vadd.f32 %v59, %v278
    %v280 = vpop.f32.mrf.mxu0
    %281 = vmatprep.mubr.f32.mxu0 0.0
    %282 = vmatmul.mubr.f32.gmra.mxu0 %v111
    %v283 = vpop.f32.mrf.mxu0
    %v284 = vadd.f32 %v59, %v283
    %v285 = vpop.f32.mrf.mxu0
    %286 = vmatprep.mubr.f32.mxu0 0.0
    %287 = vmatmul.mubr.f32.gmra.mxu0 %v114
    %v288 = vpop.f32.mrf.mxu0
    %v289 = vadd.f32 %v59, %v288
    %v290 = vpop.f32.mrf.mxu0
    %291 = vmatprep.mubr.f32.mxu0 0.0
    %292 = vmatmul.mubr.f32.gmra.mxu0 %v117
    %v293 = vpop.f32.mrf.mxu0
    %v294 = vadd.f32 %v59, %v293
    %v295 = vpop.f32.mrf.mxu0
    %296 = vmatprep.mubr.f32.mxu0 0.0
    %297 = vmatmul.mubr.f32.gmra.mxu0 %v120
    %v298 = vpop.f32.mrf.mxu0
    %v299 = vadd.f32 %v59, %v298
    %v300 = vpop.f32.mrf.mxu0
    %301 = vmatprep.mubr.f32.mxu0 0.0
    %302 = vmatmul.mubr.f32.gmra.mxu0 %v123
    %v303 = vpop.f32.mrf.mxu0
    %v304 = vadd.f32 %v59, %v303
    %v305 = vpop.f32.mrf.mxu0
    %306 = vmatprep.mubr.f32.mxu0 0.0
    %307 = vmatmul.mubr.f32.gmra.mxu0 %v126
    %v308 = vpop.f32.mrf.mxu0
    %v309 = vadd.f32 %v59, %v308
    %v310 = vpop.f32.mrf.mxu0
    %311 = vmatprep.mubr.f32.mxu0 0.0
    %312 = vmatmul.mubr.f32.gmra.mxu0 %v129
    %v313 = vpop.f32.mrf.mxu0
    %v314 = vadd.f32 %v59, %v313
    %v315 = vpop.f32.mrf.mxu0
    %316 = vmatprep.mubr.f32.mxu0 0.0
    %317 = vmatmul.mubr.f32.gmra.mxu0 %v132
    %v318 = vpop.f32.mrf.mxu0
    %v319 = vadd.f32 %v59, %v318
    %v320 = vpop.f32.mrf.mxu0
    %321 = vmatprep.mubr.f32.mxu0 0.0
    %322 = vmatmul.mubr.f32.gmra.mxu0 %v135
    %v323 = vpop.f32.mrf.mxu0
    %v324 = vadd.f32 %v59, %v323
    %v325 = vpop.f32.mrf.mxu0
    %326 = vdwg.mxu0
    %v327 = vmax.f32 %v204, 0.0
    %v328 = vmax.f32 %v209, 0.0
    %v329 = vmax.f32 %v214, 0.0
    %v330 = vmax.f32 %v219, 0.0
    %v331 = vmax.f32 %v224, 0.0
    %v332 = vmax.f32 %v229, 0.0
    %v333 = vmax.f32 %v234, 0.0
    %v334 = vmax.f32 %v239, 0.0
    %v335 = vmax.f32 %v244, 0.0
    %v336 = vmax.f32 %v249, 0.0
    %v337 = vmax.f32 %v254, 0.0
    %v338 = vmax.f32 %v259, 0.0
    %v339 = vmax.f32 %v264, 0.0
    %v340 = vmax.f32 %v269, 0.0
    %v341 = vmax.f32 %v274, 0.0
    %v342 = vmax.f32 %v279, 0.0
    %v343 = vmax.f32 %v284, 0.0
    %v344 = vmax.f32 %v289, 0.0
    %v345 = vmax.f32 %v294, 0.0
    %v346 = vmax.f32 %v299, 0.0
    %v347 = vmax.f32 %v304, 0.0
    %v348 = vmax.f32 %v309, 0.0
    %v349 = vmax.f32 %v314, 0.0
    %v350 = vmax.f32 %v319, 0.0
    %v351 = vmax.f32 %v324, 0.0
    %v352 = vld [vmem:[%s3] sm:$0xff]
    %v353 = vld [vmem:[%s3 + $0x8] sm:$0xff]
    %v354 = vld [vmem:[%s3 + $0x10] sm:$0xff]
    %v355 = vld [vmem:[%s3 + $0x18] sm:$0xff]
    %v356 = vld [vmem:[%s3 + $0x20] sm:$0xff]
    %v357 = vld [vmem:[%s3 + $0x28] sm:$0xff]
    %v358 = vld [vmem:[%s3 + $0x30] sm:$0xff]
    %v359 = vld [vmem:[%s3 + $0x38] sm:$0xff]
    %v360 = vld [vmem:[%s4] sm:$0x1]
    %v362 = vlaneseq
    %v363 = vshrl.u32 %v362, 7
    %v364 = vsub.s32 0, %v363
    %v365 = vrot.slane %v360, %v364
    %v368 = vsel %vm61, %v327, 0
    %v371 = vsel %vm61, %v328, 0
    %v374 = vsel %vm61, %v329, 0
    %v377 = vsel %vm61, %v330, 0
    %v380 = vsel %vm61, %v331, 0
    %v383 = vsel %vm61, %v332, 0
    %v386 = vsel %vm61, %v333, 0
    %v389 = vsel %vm61, %v334, 0
    %v392 = vsel %vm61, %v335, 0
    %v395 = vsel %vm61, %v336, 0
    %v398 = vsel %vm61, %v337, 0
    %v401 = vsel %vm61, %v338, 0
    %v404 = vsel %vm61, %v339, 0
    %v407 = vsel %vm61, %v340, 0
    %v410 = vsel %vm61, %v341, 0
    %v413 = vsel %vm61, %v342, 0
    %v416 = vsel %vm61, %v343, 0
    %v419 = vsel %vm61, %v344, 0
    %v422 = vsel %vm61, %v345, 0
    %v425 = vsel %vm61, %v346, 0
    %v428 = vsel %vm61, %v347, 0
    %v431 = vsel %vm61, %v348, 0
    %v434 = vsel %vm61, %v349, 0
    %v437 = vsel %vm61, %v350, 0
    %v440 = vsel %vm61, %v351, 0
    %442 = vmatprep.subr.mxu0 0.0
    %443 = vmatpush1.msra.mxu0 0.0
    %444 = vmatprep.subr.mxu0 0.0
    %445 = vmatpush1.msra.mxu0 0.0
    %446 = vmatprep.subr.mxu0 0.0
    %447 = vmatpush1.msra.mxu0 0.0
    %448 = vmatprep.subr.mxu0 0.0
    %449 = vmatpush1.msra.mxu0 0.0
    %450 = vmatprep.subr.mxu0 0.0
    %451 = vmatpush1.msra.mxu0 0.0
    %452 = vmatprep.subr.mxu0 0.0
    %453 = vmatpush1.msra.mxu0 0.0
    %454 = vmatprep.subr.mxu0 0.0
    %455 = vmatpush1.msra.mxu0 0.0
    %456 = vmatprep.subr.mxu0 0.0
    %457 = vmatpush1.msra.mxu0 0.0
    %458 = vmatprep.subr.mxu0 0.0
    %459 = vmatpush1.msra.mxu0 %v359
    %460 = vmatprep.subr.mxu0 0.0
    %461 = vmatpush1.msra.mxu0 %v358
    %462 = vmatprep.subr.mxu0 0.0
    %463 = vmatpush1.msra.mxu0 %v357
    %464 = vmatprep.subr.mxu0 0.0
    %465 = vmatpush1.msra.mxu0 %v356
    %466 = vmatprep.subr.mxu0 0.0
    %467 = vmatpush1.msra.mxu0 %v355
    %468 = vmatprep.subr.mxu0 0.0
    %469 = vmatpush1.msra.mxu0 %v354
    %470 = vmatprep.subr.mxu0 0.0
    %471 = vmatpush1.msra.mxu0 %v353
    %472 = vmatprep.subr.mxu0 0.0
    %473 = vmatpush1.msra.mxu0 %v352
    %474 = vmatprep.subr.mxu0 0.0
    %475 = vmatpush2.msra.mxu0 0.0
    %476 = vmatprep.subr.mxu0 0.0
    %477 = vmatpush2.msra.mxu0 0.0
    %478 = vmatprep.subr.mxu0 0.0
    %479 = vmatpush2.msra.mxu0 0.0
    %480 = vmatprep.subr.mxu0 0.0
    %481 = vmatpush2.msra.mxu0 0.0
    %482 = vmatprep.subr.mxu0 0.0
    %483 = vmatpush2.msra.mxu0 0.0
    %484 = vmatprep.subr.mxu0 0.0
    %485 = vmatpush2.msra.mxu0 0.0
    %486 = vmatprep.subr.mxu0 0.0
    %487 = vmatpush2.msra.mxu0 0.0
    %488 = vmatprep.subr.mxu0 0.0
    %489 = vmatpush2.msra.mxu0 0.0
    %490 = vmatprep.subr.mxu0 0.0
    %491 = vmatpush2.msra.mxu0 0.0
    %492 = vmatprep.subr.mxu0 0.0
    %493 = vmatpush2.msra.mxu0 0.0
    %494 = vmatprep.subr.mxu0 0.0
    %495 = vmatpush2.msra.mxu0 0.0
    %496 = vmatprep.subr.mxu0 0.0
    %497 = vmatpush2.msra.mxu0 0.0
    %498 = vmatprep.subr.mxu0 0.0
    %499 = vmatpush2.msra.mxu0 0.0
    %500 = vmatprep.subr.mxu0 0.0
    %501 = vmatpush2.msra.mxu0 0.0
    %502 = vmatprep.subr.mxu0 0.0
    %503 = vmatpush2.msra.mxu0 0.0
    %504 = vmatprep.subr.mxu0 0.0
    %505 = vmatpush2.msra.mxu0 0.0
    %506 = vmatprep.mubr.f32.mxu0 0.0
    %507 = vmatmul.mubr.f32.gmra.mxu0 %v368
    %v508 = vpop.f32.mrf.mxu0
    %v509 = vadd.f32 %v365, %v508
    %v510 = vpop.f32.mrf.mxu0
    %511 = vmatprep.mubr.f32.mxu0 0.0
    %512 = vmatmul.mubr.f32.gmra.mxu0 %v371
    %v513 = vpop.f32.mrf.mxu0
    %v514 = vadd.f32 %v365, %v513
    %v515 = vpop.f32.mrf.mxu0
    %516 = vmatprep.mubr.f32.mxu0 0.0
    %517 = vmatmul.mubr.f32.gmra.mxu0 %v374
    %v518 = vpop.f32.mrf.mxu0
    %v519 = vadd.f32 %v365, %v518
    %v520 = vpop.f32.mrf.mxu0
    %521 = vmatprep.mubr.f32.mxu0 0.0
    %522 = vmatmul.mubr.f32.gmra.mxu0 %v377
    %v523 = vpop.f32.mrf.mxu0
    %v524 = vadd.f32 %v365, %v523
    %v525 = vpop.f32.mrf.mxu0
    %526 = vmatprep.mubr.f32.mxu0 0.0
    %527 = vmatmul.mubr.f32.gmra.mxu0 %v380
    %v528 = vpop.f32.mrf.mxu0
    %v529 = vadd.f32 %v365, %v528
    %v530 = vpop.f32.mrf.mxu0
    %531 = vmatprep.mubr.f32.mxu0 0.0
    %532 = vmatmul.mubr.f32.gmra.mxu0 %v383
    %v533 = vpop.f32.mrf.mxu0
    %v534 = vadd.f32 %v365, %v533
    %v535 = vpop.f32.mrf.mxu0
    %536 = vmatprep.mubr.f32.mxu0 0.0
    %537 = vmatmul.mubr.f32.gmra.mxu0 %v386
    %v538 = vpop.f32.mrf.mxu0
    %v539 = vadd.f32 %v365, %v538
    %v540 = vpop.f32.mrf.mxu0
    %541 = vmatprep.mubr.f32.mxu0 0.0
    %542 = vmatmul.mubr.f32.gmra.mxu0 %v389
    %v543 = vpop.f32.mrf.mxu0
    %v544 = vadd.f32 %v365, %v543
    %v545 = vpop.f32.mrf.mxu0
    %546 = vmatprep.mubr.f32.mxu0 0.0
    %547 = vmatmul.mubr.f32.gmra.mxu0 %v392
    %v548 = vpop.f32.mrf.mxu0
    %v549 = vadd.f32 %v365, %v548
    %v550 = vpop.f32.mrf.mxu0
    %551 = vmatprep.mubr.f32.mxu0 0.0
    %552 = vmatmul.mubr.f32.gmra.mxu0 %v395
    %v553 = vpop.f32.mrf.mxu0
    %v554 = vadd.f32 %v365, %v553
    %v555 = vpop.f32.mrf.mxu0
    %556 = vmatprep.mubr.f32.mxu0 0.0
    %557 = vmatmul.mubr.f32.gmra.mxu0 %v398
    %v558 = vpop.f32.mrf.mxu0
    %v559 = vadd.f32 %v365, %v558
    %v560 = vpop.f32.mrf.mxu0
    %561 = vmatprep.mubr.f32.mxu0 0.0
    %562 = vmatmul.mubr.f32.gmra.mxu0 %v401
    %v563 = vpop.f32.mrf.mxu0
    %v564 = vadd.f32 %v365, %v563
    %v565 = vpop.f32.mrf.mxu0
    %566 = vmatprep.mubr.f32.mxu0 0.0
    %567 = vmatmul.mubr.f32.gmra.mxu0 %v404
    %v568 = vpop.f32.mrf.mxu0
    %v569 = vadd.f32 %v365, %v568
    %v570 = vpop.f32.mrf.mxu0
    %571 = vmatprep.mubr.f32.mxu0 0.0
    %572 = vmatmul.mubr.f32.gmra.mxu0 %v407
    %v573 = vpop.f32.mrf.mxu0
    %v574 = vadd.f32 %v365, %v573
    %v575 = vpop.f32.mrf.mxu0
    %576 = vmatprep.mubr.f32.mxu0 0.0
    %577 = vmatmul.mubr.f32.gmra.mxu0 %v410
    %v578 = vpop.f32.mrf.mxu0
    %v579 = vadd.f32 %v365, %v578
    %v580 = vpop.f32.mrf.mxu0
    %581 = vmatprep.mubr.f32.mxu0 0.0
    %582 = vmatmul.mubr.f32.gmra.mxu0 %v413
    %v583 = vpop.f32.mrf.mxu0
    %v584 = vadd.f32 %v365, %v583
    %v585 = vpop.f32.mrf.mxu0
    %586 = vmatprep.mubr.f32.mxu0 0.0
    %587 = vmatmul.mubr.f32.gmra.mxu0 %v416
    %v588 = vpop.f32.mrf.mxu0
    %v589 = vadd.f32 %v365, %v588
    %v590 = vpop.f32.mrf.mxu0
    %591 = vmatprep.mubr.f32.mxu0 0.0
    %592 = vmatmul.mubr.f32.gmra.mxu0 %v419
    %v593 = vpop.f32.mrf.mxu0
    %v594 = vadd.f32 %v365, %v593
    %v595 = vpop.f32.mrf.mxu0
    %596 = vmatprep.mubr.f32.mxu0 0.0
    %597 = vmatmul.mubr.f32.gmra.mxu0 %v422
    %v598 = vpop.f32.mrf.mxu0
    %v599 = vadd.f32 %v365, %v598
    %v600 = vpop.f32.mrf.mxu0
    %601 = vmatprep.mubr.f32.mxu0 0.0
    %602 = vmatmul.mubr.f32.gmra.mxu0 %v425
    %v603 = vpop.f32.mrf.mxu0
    %v604 = vadd.f32 %v365, %v603
    %v605 = vpop.f32.mrf.mxu0
    %606 = vmatprep.mubr.f32.mxu0 0.0
    %607 = vmatmul.mubr.f32.gmra.mxu0 %v428
    %v608 = vpop.f32.mrf.mxu0
    %v609 = vadd.f32 %v365, %v608
    %v610 = vpop.f32.mrf.mxu0
    %611 = vmatprep.mubr.f32.mxu0 0.0
    %612 = vmatmul.mubr.f32.gmra.mxu0 %v431
    %v613 = vpop.f32.mrf.mxu0
    %v614 = vadd.f32 %v365, %v613
    %v615 = vpop.f32.mrf.mxu0
    %616 = vmatprep.mubr.f32.mxu0 0.0
    %617 = vmatmul.mubr.f32.gmra.mxu0 %v434
    %v618 = vpop.f32.mrf.mxu0
    %v619 = vadd.f32 %v365, %v618
    %v620 = vpop.f32.mrf.mxu0
    %621 = vmatprep.mubr.f32.mxu0 0.0
    %622 = vmatmul.mubr.f32.gmra.mxu0 %v437
    %v623 = vpop.f32.mrf.mxu0
    %v624 = vadd.f32 %v365, %v623
    %v625 = vpop.f32.mrf.mxu0
    %626 = vmatprep.mubr.f32.mxu0 0.0
    %627 = vmatmul.mubr.f32.gmra.mxu0 %v440
    %v628 = vpop.f32.mrf.mxu0
    %v629 = vadd.f32 %v365, %v628
    %v630 = vpop.f32.mrf.mxu0
    %631 = vdwg.mxu0
    %632 = vst [vmem:[#allocation2] sm:$0xff] %v509
    %633 = vst [vmem:[#allocation2 + $0x8] sm:$0xff] %v514
    %634 = vst [vmem:[#allocation2 + $0x10] sm:$0xff] %v519
    %635 = vst [vmem:[#allocation2 + $0x18] sm:$0xff] %v524
    %636 = vst [vmem:[#allocation2 + $0x20] sm:$0xff] %v529
    %637 = vst [vmem:[#allocation2 + $0x28] sm:$0xff] %v534
    %638 = vst [vmem:[#allocation2 + $0x30] sm:$0xff] %v539
    %639 = vst [vmem:[#allocation2 + $0x38] sm:$0xff] %v544
    %640 = vst [vmem:[#allocation2 + $0x40] sm:$0xff] %v549
    %641 = vst [vmem:[#allocation2 + $0x48] sm:$0xff] %v554
    %642 = vst [vmem:[#allocation2 + $0x50] sm:$0xff] %v559
    %643 = vst [vmem:[#allocation2 + $0x58] sm:$0xff] %v564
    %644 = vst [vmem:[#allocation2 + $0x60] sm:$0xff] %v569
    %645 = vst [vmem:[#allocation2 + $0x68] sm:$0xff] %v574
    %646 = vst [vmem:[#allocation2 + $0x70] sm:$0xff] %v579
    %647 = vst [vmem:[#allocation2 + $0x78] sm:$0xff] %v584
    %648 = vst [vmem:[#allocation2 + $0x80] sm:$0xff] %v589
    %649 = vst [vmem:[#allocation2 + $0x88] sm:$0xff] %v594
    %650 = vst [vmem:[#allocation2 + $0x90] sm:$0xff] %v599
    %651 = vst [vmem:[#allocation2 + $0x98] sm:$0xff] %v604
    %652 = vst [vmem:[#allocation2 + $0xa0] sm:$0xff] %v609
    %653 = vst [vmem:[#allocation2 + $0xa8] sm:$0xff] %v614
    %654 = vst [vmem:[#allocation2 + $0xb0] sm:$0xff] %v619
    %655 = vst [vmem:[#allocation2 + $0xb8] sm:$0xff] %v624
    %656 = vst [vmem:[#allocation2 + $0xc0] sm:$0xff] %v629
    // Predicated region
    $region22: #{tpu_custom_call.1} parent=1 // pred_check
      _
    $region23: #{tpu_custom_call.1} parent=1 // pred_check_branch
      %658 = sbr.rel (0) target = $region25
    $region24: #{tpu_custom_call.1} parent=1 // pred_region
      %s660 = ssub.s32 3200, 3200
      %661 = vsyncadd [#allocation3], %s660
      %s662 = sshll.u32 [#allocation2], 4
      %s663 = int_to_ptr.vmem [resolvable:$true] %s662
      %668 = dma.vmem_to_hbm [thread:$0]  %s663, 3200, %s5, [#allocation3], 128, 128, 8
    $region25: #{tpu_custom_call.1} parent=1 // pred_fallthru
      _
    // Predicated region
    $region26: #{tpu_custom_call.1} parent=1 // pred_check
      _
    $region27: #{tpu_custom_call.1} parent=1 // pred_check_branch
      %670 = sbr.rel (0) target = $region29
    $region28: #{tpu_custom_call.1} parent=1 // pred_region
      %671 = dma.done [#allocation3], 3200
    $region29: #{tpu_custom_call.1} parent=1 // pred_fallthru
      _
    %672 = vsyncpa [#allocation3], 1

</llo_original>
